<compile_context>
chip_gen: v5e
topology: v5e:2x2
jax: 0.10.0
libtpu: 0.0.40
codegen_flags: <defaults>
</compile_context>

<pallas_src>
import math

import jax
import jax.numpy as jnp
from jax.experimental import pallas as pl
from jax.experimental.pallas import tpu as pltpu


# ----------------------------------------------------------------------------
# Config (mirrors the fields the PyTorch module reads)
# ----------------------------------------------------------------------------
class Config:
    seq_len = 8
    hidden_size = 32
    return_pe = True


# ----------------------------------------------------------------------------
# Buffer construction (== nn.Module.__init__ / register_buffer)
# ----------------------------------------------------------------------------
def make_sinusoidal_pe(seq_len: int, hidden_size: int) -> jnp.ndarray:
    positions = jnp.arange(0, seq_len, dtype=jnp.float32)[:, None]          # (T, 1)
    div_term = jnp.exp(
        -jnp.arange(0, hidden_size, 2, dtype=jnp.float32)
        * math.log(10000.0) / hidden_size
    )                                                                        # (D/2,)
    angles = positions * div_term                                            # (T, D/2)
    pe = jnp.zeros((seq_len, hidden_size), dtype=jnp.float32)
    pe = pe.at[:, 0::2].set(jnp.sin(angles))
    pe = pe.at[:, 1::2].set(jnp.cos(angles))
    return pe[None, :, :]                                                    # (1, T, D)


# ----------------------------------------------------------------------------
# Pallas kernels
# ----------------------------------------------------------------------------
def _add_pe_flat_kernel(x_ref, pe_ref, out_ref):
    # x_ref:   (b_tile, T*D)   batch tile, lane-dense rows
    # pe_ref:  (1,      T*D)   positional encodings (same block every step)
    # out_ref: (b_tile, T*D)
    out_ref[...] = x_ref[...] + pe_ref[...]          # (1, TD) broadcasts over rows


def _add_pe_3d_kernel(x_ref, pe_ref, out_ref):
    # Fallback when T*D is not a multiple of 128 (keeps (1, T, D) layout).
    out_ref[...] = x_ref[...] + pe_ref[...]


def _choose_b_tile(B: int, row_bytes: int, budget_bytes: int = 2 << 20) -> int:
    """Largest batch tile with tile_bytes <= budget that also satisfies the
    (8, 128) sublane rule (tile == full B, or a multiple of 8 that divides B)."""
    if B * row_bytes <= budget_bytes:
        return B
    t = (budget_bytes // max(row_bytes, 1)) // 8 * 8
    t = max(8, min(t, B // 8 * 8))
    while t >= 8:
        if B % t == 0:
            return t
        t -= 8
    return B  # fallback: single full-batch tile (always shape-legal)


# ----------------------------------------------------------------------------
# Forward wrapper
# ----------------------------------------------------------------------------
def position_embeddings_forward(x: jnp.ndarray, pe_buffer: jnp.ndarray,
                                return_pe: bool = True):
    """Forward pass of PositionEmbeddings.

    x:         (B, T, D) float32
    pe_buffer: (1, seq_len, D) float32 with seq_len >= T
    """
    B, T, D = x.shape
    pe_slice = pe_buffer[:, :T, :]                   # returned directly (no kernel work)
    TD = T * D

    if TD % 128 == 0:
        # Lane-dense path: rows of length T*D (multiple of 128) -> unmasked stores.
        x2 = x.reshape(B, TD)
        pe2 = pe_slice.reshape(1, TD)
        row_bytes = TD * x2.dtype.itemsize
        b_tile = _choose_b_tile(B, row_bytes)
        grid = (B // b_tile,)

        out2 = pl.pallas_call(
            _add_pe_flat_kernel,
            out_shape=jax.ShapeDtypeStruct((B, TD), x.dtype),
            grid_spec=pltpu.PrefetchScalarGridSpec(
                num_scalar_prefetch=0,
                grid=grid,
                in_specs=[
                    pl.BlockSpec((b_tile, TD), lambda b: (b, 0)),   # x tile
                    pl.BlockSpec((1, TD), lambda b: (0, 0)),        # PE (constant block)
                ],
                out_specs=pl.BlockSpec((b_tile, TD), lambda b: (b, 0)),
            ),
            compiler_params=pltpu.CompilerParams(
                dimension_semantics=("parallel",),
            ),
        )(x2, pe2)
        out = out2.reshape(B, T, D)
    else:
        # Fallback: keep (B, T, D) layout, one batch element per grid step.
        # Block dims (1, T, D) equal the full (T, D) extents -> layout-legal.
        out = pl.pallas_call(
            _add_pe_3d_kernel,
            out_shape=jax.ShapeDtypeStruct((B, T, D), x.dtype),
            grid_spec=pltpu.PrefetchScalarGridSpec(
                num_scalar_prefetch=0,
                grid=(B,),
                in_specs=[
                    pl.BlockSpec((1, T, D), lambda b: (b, 0, 0)),
                    pl.BlockSpec((1, T, D), lambda b: (0, 0, 0)),
                ],
                out_specs=pl.BlockSpec((1, T, D), lambda b: (b, 0, 0)),
            ),
            compiler_params=pltpu.CompilerParams(
                dimension_semantics=("parallel",),
            ),
        )(x, pe_slice)

    if return_pe:
        return out, pe_slice
    return out


# ----------------------------------------------------------------------------
# Main
# ----------------------------------------------------------------------------
if __name__ == "__main__":
    cfg = Config()

    B, T, D = 2, cfg.seq_len, cfg.hidden_size
    key = jax.random.PRNGKey(0)
    x = jax.random.normal(key, (B, T, D), dtype=jnp.float32)

    pe_buffer = make_sinusoidal_pe(cfg.seq_len, cfg.hidden_size)

    out, pe_out = position_embeddings_forward(x, pe_buffer, return_pe=cfg.return_pe)
    out = jax.block_until_ready(out)
    pe_out = jax.block_until_ready(pe_out)

    # Correctness check against the pure-JAX reference of the PyTorch forward.
    ref_out = x + pe_buffer[:, :T, :]
    ref_pe = pe_buffer[:, :T, :]
    assert out.shape == (B, T, D)
    assert pe_out.shape == (1, T, D)
    assert jnp.allclose(out, ref_out, atol=1e-6)
    assert jnp.allclose(pe_out, ref_pe, atol=1e-6)

    print("KERNEL_OK")
</pallas_src>

<mosaic_0001>
module attributes {stable_mosaic.version = 11 : i64} {
  func.func @_add_pe_flat_kernel(%arg0: i32, %arg1: memref<2x256xf32, #tpu.memory_space<vmem>>, %arg2: memref<1x256xf32, #tpu.memory_space<vmem>>, %arg3: memref<2x256xf32, #tpu.memory_space<vmem>>) attributes {dimension_semantics = [#tpu.dimension_semantics<parallel>], iteration_bounds = array<i64: 1>, scalar_prefetch = 0 : i64, scratch_operands = 0 : i64, tpu.core_type = #tpu.core_type<tc>, window_params = [{transform_indices = @transform_0, window_bounds = array<i64: 2, 256>}, {pipeline_mode = #tpu.pipeline_mode<synchronous>, transform_indices = @transform_1, window_bounds = array<i64: 1, 256>}, {transform_indices = @transform_2, window_bounds = array<i64: 2, 256>}]} {
    %c0 = arith.constant 0 : index
    %c0_0 = arith.constant 0 : index
    %0 = vector.load %arg1[%c0, %c0_0] : memref<2x256xf32, #tpu.memory_space<vmem>>, vector<2x256xf32>
    %c0_1 = arith.constant 0 : index
    %c0_2 = arith.constant 0 : index
    %1 = vector.load %arg2[%c0_1, %c0_2] : memref<1x256xf32, #tpu.memory_space<vmem>>, vector<1x256xf32>
    %2 = vector.broadcast %1 : vector<1x256xf32> to vector<2x256xf32>
    %3 = arith.addf %0, %2 : vector<2x256xf32>
    %c0_3 = arith.constant 0 : index
    %c0_4 = arith.constant 0 : index
    %4 = vector.load %arg3[%c0_3, %c0_4] : memref<2x256xf32, #tpu.memory_space<vmem>>, vector<2x256xf32>
    tpu.vector_store %arg3[%c0_3, %c0_4], %3 {strides = array<i32>} : memref<2x256xf32, #tpu.memory_space<vmem>>, vector<2x256xf32>,
    return
  }
  func.func @transform_0(%arg0: i32) -> (i32, i32) {
    %c0_i32 = arith.constant 0 : i32
    %c0_i32_0 = arith.constant 0 : i32
    return %arg0, %c0_i32 : i32, i32
  }
  func.func @transform_1(%arg0: i32) -> (i32, i32) {
    %c0_i32 = arith.constant 0 : i32
    %c0_i32_0 = arith.constant 0 : i32
    %c0_i32_1 = arith.constant 0 : i32
    return %c0_i32, %c0_i32_0 : i32, i32
  }
  func.func @transform_2(%arg0: i32) -> (i32, i32) {
    %c0_i32 = arith.constant 0 : i32
    %c0_i32_0 = arith.constant 0 : i32
    return %arg0, %c0_i32 : i32, i32
  }
}

</mosaic_0001>

<llo_original>
// kernel: tpu_custom_call.1
$region0: #{tpu_custom_call.1}
  #allocation0 [shape = 'u32[]', space=smem, size = 0x4, offset = 0x4, fixed_abs, tag = 'smem constant byte address 0x4 - core index']
  #allocation1 [shape = 'u32[72,128]{1,0:T(1,128)}', space=vmem, size = 0x9000, scoped, tag = 'internal scratch']
  %s0 = inlined_call_operand.hbm [shape: f32[2,256], index: 0, kind: input, shape index: {}]
  %s1 = inlined_call_operand.hbm [shape: f32[1,256], index: 1, kind: input, shape index: {}]
  %s2 = inlined_call_operand.hbm [shape: f32[2,256], index: 2, kind: output, shape index: {}]
  %s3 = sld [smem:[#allocation0]]
  $region26: #{tpu_custom_call.1} parent=0
    _
  %s5 = ssub.s32 1, %s3
  %s6 = scalar_select 0, %s5, %s3
  $region1: #{tpu_custom_call.1} parent=0
    #allocation2 [shape = 'u8[2048]{0}', space=vmem, size = 0x800, scoped, tag = 'input window, operand 0, single buffered']
    #allocation3 [shape = 's32[1]{0}', space=sflag, size = 0x4, scoped, tag = 'scoped memory for tpu_custom_call.1']
    #allocation4 [shape = 's32[1]{0}', space=sflag, size = 0x4, scoped, tag = 'scoped memory for tpu_custom_call.1']
    #allocation5 [shape = 'u8[1024]{0}', space=vmem, size = 0x400, scoped, tag = 'input window, operand 1, single buffered']
    #allocation6 [shape = 's32[1]{0}', space=sflag, size = 0x4, scoped, tag = 'scoped memory for tpu_custom_call.1']
    #allocation7 [shape = 'u8[2048]{0}', space=vmem, size = 0x800, scoped, tag = 'output window, operand 0, single buffered']
    %7 = vsyncpa [#allocation3], 0
    %8 = vsyncpa [#allocation6], 0
    %9 = vsyncpa [#allocation4], 0
    // Predicated region
    $region2: #{tpu_custom_call.1} parent=1 // pred_check
      _
    $region3: #{tpu_custom_call.1} parent=1 // pred_check_branch
      %11 = sbr.rel (0) target = $region5
    $region4: #{tpu_custom_call.1} parent=1 // pred_region
      %13 = vsyncadd [#allocation3], 0
      %s15 = sshll.u32 %s0, 4
      %s16 = int_to_ptr.hbm [resolvable:$true] %s15
      %s17 = sshll.u32 [#allocation2], 4
      %s18 = int_to_ptr.vmem [resolvable:$true] %s17
      %20 = dma.hbm_to_vmem [thread:$0]  %s16, 64, %s18, [#allocation3]
    $region5: #{tpu_custom_call.1} parent=1 // pred_fallthru
      _
    // Predicated region
    $region6: #{tpu_custom_call.1} parent=1 // pred_check
      _
    $region7: #{tpu_custom_call.1} parent=1 // pred_check_branch
      %22 = sbr.rel (0) target = $region9
    $region8: #{tpu_custom_call.1} parent=1 // pred_region
      %24 = vsyncadd [#allocation6], 0
      %s26 = sshll.u32 %s1, 4
      %s27 = int_to_ptr.hbm [resolvable:$true] %s26
      %s28 = sshll.u32 [#allocation5], 4
      %s29 = int_to_ptr.vmem [resolvable:$true] %s28
      %31 = dma.hbm_to_vmem [thread:$0]  %s27, 32, %s29, [#allocation6]
    $region9: #{tpu_custom_call.1} parent=1 // pred_fallthru
      _
    // Predicated region
    $region10: #{tpu_custom_call.1} parent=1 // pred_check
      _
    $region11: #{tpu_custom_call.1} parent=1 // pred_check_branch
      %33 = sbr.rel (0) target = $region13
    $region12: #{tpu_custom_call.1} parent=1 // pred_region
      %35 = dma.done [#allocation3], 64
    $region13: #{tpu_custom_call.1} parent=1 // pred_fallthru
      _
    // Predicated region
    $region14: #{tpu_custom_call.1} parent=1 // pred_check
      _
    $region15: #{tpu_custom_call.1} parent=1 // pred_check_branch
      %37 = sbr.rel (0) target = $region17
    $region16: #{tpu_custom_call.1} parent=1 // pred_region
      %39 = dma.done [#allocation6], 32
    $region17: #{tpu_custom_call.1} parent=1 // pred_fallthru
      _
    %v40 = vld [vmem:[#allocation2] sm:$0xf]
    %v41 = vld [vmem:[#allocation5] sm:$0x3]
    %v43 = vperm.slane %v41, 0
    %v44 = vperm.slane %v41, 1
    %v45 = vrot.slane %v44, 6
    %vm46 = vcmask 1041408
    %v47 = vsel %vm46, %v43, %v45
    %v49 = vadd.f32 %v40, %v47
    %50 = vst [vmem:[#allocation7] sm:$0xf] %v49
    // Predicated region
    $region18: #{tpu_custom_call.1} parent=1 // pred_check
      _
    $region19: #{tpu_custom_call.1} parent=1 // pred_check_branch
      %52 = sbr.rel (0) target = $region21
    $region20: #{tpu_custom_call.1} parent=1 // pred_region
      %54 = vsyncadd [#allocation4], 0
      %s56 = sshll.u32 [#allocation7], 4
      %s57 = int_to_ptr.vmem [resolvable:$true] %s56
      %s58 = sshll.u32 %s2, 4
      %s59 = int_to_ptr.hbm [resolvable:$true] %s58
      %61 = dma.vmem_to_hbm [thread:$0]  %s57, 64, %s59, [#allocation4]
    $region21: #{tpu_custom_call.1} parent=1 // pred_fallthru
      _
    // Predicated region
    $region22: #{tpu_custom_call.1} parent=1 // pred_check
      _
    $region23: #{tpu_custom_call.1} parent=1 // pred_check_branch
      %63 = sbr.rel (0) target = $region25
    $region24: #{tpu_custom_call.1} parent=1 // pred_region
      %65 = dma.done [#allocation4], 64
    $region25: #{tpu_custom_call.1} parent=1 // pred_fallthru
      _
    %66 = vsyncpa [#allocation3], 1
    %67 = vsyncpa [#allocation6], 1
    %68 = vsyncpa [#allocation4], 1

</llo_original>
